<compile_context>
chip_gen: v7x
topology: tpu7x:2x2x1
jax: 0.10.0
libtpu: 0.0.40
codegen_flags: <defaults>
</compile_context>

<pallas_src>
import jax
import jax.numpy as jnp
from jax import lax
from jax.experimental import pallas as pl
from jax.experimental.pallas import tpu as pltpu


def _elu(x, alpha=1.0):
    # ELU(alpha): x if x > 0 else alpha * (exp(x) - 1).  Applied in f32 only.
    return jnp.where(x > 0, x, alpha * (jnp.exp(x) - 1.0))


def seanet_resblock_kernel(x_ref, halo_ref, w1_ref, b1_ref, w2_ref, b2_ref, o_ref):
    """One (batch, time-tile) block per grid step, NCW layout.

    x_ref   : (1, C, tT)    input tile, native dtype (time on lanes)
    halo_ref: (1, 1, C, 2)  raw left/right neighbour columns, native dtype
    w1_ref  : (H, 3C)       im2col conv1 weights [tap-1 | tap0 | tap+1], compute dtype
    b1_ref  : (H, 1)        f32
    w2_ref  : (C, H)        conv2 (k=1) weights, compute dtype
    b2_ref  : (C, 1)        f32
    o_ref   : (1, C, tT)    output tile, native dtype
    """
    cdt = w1_ref.dtype                              # matmul compute dtype
    xf = x_ref[0].astype(jnp.float32)               # (C, tT) f32: ELU + residual
    tT = xf.shape[1]

    # --- ELU in f32, then drop to compute dtype ONCE (rolls/selects/MXU packed) ---
    h = _elu(xf).astype(cdt)                                        # (C, tT)
    halo = _elu(halo_ref[0, 0].astype(jnp.float32)).astype(cdt)     # (C, 2)
    h_lcol = halo[:, 0:1]                           # ELU(x[t0 - 1])
    h_rcol = halo[:, 1:2]                           # ELU(x[t0 + tT])

    # --- shifted taps via lane rotation (XLU) + masked edge fix, in compute dtype ---
    col = lax.broadcasted_iota(jnp.int32, (1, tT), 1)
    h_left = jnp.where(col == 0, h_lcol, pltpu.roll(h, 1, axis=1))             # h[t-1]
    h_right = jnp.where(col == tT - 1, h_rcol, pltpu.roll(h, tT - 1, axis=1))  # h[t+1]

    # --- Conv1d(k=3): single K=3C MXU matmul on the im2col operand ---
    h3 = jnp.concatenate([h_left, h, h_right], axis=0)             # (3C, tT)
    y1 = jnp.dot(w1_ref[...], h3, preferred_element_type=jnp.float32) + b1_ref[...]

    # --- ELU -> Conv1d(k=1) ---
    h1 = _elu(y1).astype(cdt)                                       # (H, tT)
    y2 = jnp.dot(w2_ref[...], h1, preferred_element_type=jnp.float32) + b2_ref[...]

    # --- true_skip residual in f32, store back in the caller's dtype ---
    o_ref[0] = (xf + y2).astype(o_ref.dtype)


def _vmem_capacity_bytes():
    try:
        return int(pltpu.get_tpu_info().vmem_capacity_bytes)
    except Exception:
        return 64 * 2**20   # conservative (v7x-sized) fallback


def _pick_time_tile(T, C, B, vmem_capacity):
    """Largest lane-dense (multiple-of-128) divisor of T whose f32 (C, tT) slab
    fits a generation-aware budget; falls back to full extent for ragged T.
    When B == 1, caps the tile so the grid has >= 2 steps (v7x has 2 TCs)."""
    if vmem_capacity >= 96 * 2**20:                  # v5e / v6e: 128 MiB VMEM
        budget = 12 * 2**20
        candidates = (4096, 2048, 1024, 512, 256, 128)
    else:                                            # v7x: 64 MiB VMEM
        budget = 4 * 2**20
        candidates = (1024, 512, 256, 128)
    divs = [c for c in candidates if c <= T and T % c == 0]
    tT = None
    for c in divs:
        if C * c * 4 <= budget:
            tT = c
            break
    if tT is None:
        tT = divs[-1] if divs else T                 # smallest lane-dense divisor, or full extent
    if B == 1 and T // tT < 2:                       # keep both v7x TensorCores busy
        smaller = [c for c in divs if c < tT]
        if smaller:
            tT = smaller[0]
    return tT


def seanet_resnet_block(x, w1, b1, w2, b2, *, time_tile=None,
                        compute_dtype=jnp.bfloat16):
    """SEANetResnetBlock forward.

    x : (B, C, T) input in PyTorch NCW layout (C = dim), any float dtype;
        output has the same dtype.
    w1: (H, C, 3), b1: (H,)   -- first StreamableConv1d (k=3, dilation=1)
    w2: (C, H, 1), b2: (C,)   -- second StreamableConv1d (k=1)
    """
    B, C, T = x.shape
    H = w1.shape[0]
    assert w1.shape == (H, C, 3) and b1.shape == (H,)
    assert w2.shape == (C, H, 1) and b2.shape == (C,)
    assert T >= 2, "reflect padding of 1 needs at least 2 time steps"

    vmem_cap = _vmem_capacity_bytes()
    tT = _pick_time_tile(T, C, B, vmem_cap) if time_tile is None else time_tile
    assert T % tT == 0, "time_tile must divide T"
    assert tT == T or tT % 128 == 0, "time_tile must be lane-dense or full-extent"
    nT = T // tT

    # Per-tile halo columns (samples just left/right of each tile, reflected at
    # the sequence edges), gathered once in the input dtype: (B, nT, C, 2).
    j = jnp.arange(nT)
    left_idx = jnp.where(j == 0, 1, j * tT - 1)               # reflect: pad[-1] = x[1]
    right_idx = jnp.where(j == nT - 1, T - 2, (j + 1) * tT)   # reflect: pad[T]  = x[T-2]
    halo = jnp.stack([x[:, :, left_idx], x[:, :, right_idx]], axis=-1)  # (B, C, nT, 2)
    halo = jnp.transpose(halo, (0, 2, 1, 3))                            # (B, nT, C, 2)

    # Weights: im2col conv1 (H, 3C) with K ordered [tap-1 | tap0 | tap+1],
    # squeezed conv2 (C, H).  Matmul operands in compute dtype, biases in f32.
    w1_i2c = jnp.transpose(w1, (0, 2, 1)).reshape(H, 3 * C).astype(compute_dtype)
    b1_c = b1.reshape(H, 1).astype(jnp.float32)
    w2_m = w2[:, :, 0].astype(compute_dtype)
    b2_c = b2.reshape(C, 1).astype(jnp.float32)

    # Scoped-VMEM budget: double-buffered tiles + weights + in-kernel temps,
    # 1.5x margin, capped below this generation's physical VMEM.
    cb = jnp.dtype(compute_dtype).itemsize
    xb = jnp.dtype(x.dtype).itemsize
    io_tiles = 2 * 2 * (C * tT * xb)                 # x in + out, double-buffered
    halo_b = 2 * (C * 2 * xb)
    weights = 2 * ((3 * H * C + C * H) * cb + (H + C) * 4)
    temps = (2 * C * tT * 4                          # xf, y2/residual (f32)
             + 6 * C * tT * cb                       # h, h_left, h_right, h3 (3C)
             + 2 * H * tT * 4                        # y1 (+ slack)
             + H * tT * cb)                          # h1
    est = io_tiles + halo_b + weights + temps
    vmem_limit = int(min(max(int(1.5 * est), 16 * 2**20), int(0.9 * vmem_cap)))

    # TODO(synk): on v7x, single-buffer the grid-invariant weight operands via
    # pipeline_mode=pl.Buffered(1) once verified on the target jax build; the
    # VMEM estimate above already counts them double-buffered.
    const = lambda b, t: (0, 0)
    out = pl.pallas_call(
        seanet_resblock_kernel,
        out_shape=jax.ShapeDtypeStruct((B, C, T), x.dtype),
        grid_spec=pltpu.PrefetchScalarGridSpec(
            num_scalar_prefetch=0,
            grid=(B, nT),
            in_specs=[
                pl.BlockSpec((1, C, tT), lambda b, t: (b, 0, t)),
                pl.BlockSpec((1, 1, C, 2), lambda b, t: (b, t, 0, 0)),
                pl.BlockSpec((H, 3 * C), const),
                pl.BlockSpec((H, 1), const),
                pl.BlockSpec((C, H), const),
                pl.BlockSpec((C, 1), const),
            ],
            out_specs=pl.BlockSpec((1, C, tT), lambda b, t: (b, 0, t)),
        ),
        compiler_params=pltpu.CompilerParams(
            # Both axes are independent -> shardable across v7x's 2 TensorCores.
            dimension_semantics=("parallel", "parallel"),
            vmem_limit_bytes=vmem_limit,
        ),
    )(x, halo, w1_i2c, b1_c, w2_m, b2_c)
    return out


def _reference(x_ncw, w1, b1, w2, b2):
    """Pure-JAX reference mirroring the PyTorch module (NCW layout, f32)."""
    h = _elu(x_ncw)
    # non-causal reflect pad: padding_total = 2 -> (left=1, right=1), extra=0
    hp = jnp.pad(h, ((0, 0), (0, 0), (1, 1)), mode="reflect")
    dn = lax.conv_dimension_numbers(hp.shape, w1.shape, ("NCW", "OIW", "NCW"))
    y1 = lax.conv_general_dilated(hp, w1, (1,), "VALID", dimension_numbers=dn)
    y1 = y1 + b1[None, :, None]
    h1 = _elu(y1)
    dn2 = lax.conv_dimension_numbers(h1.shape, w2.shape, ("NCW", "OIW", "NCW"))
    y2 = lax.conv_general_dilated(h1, w2, (1,), "VALID", dimension_numbers=dn2)
    y2 = y2 + b2[None, :, None]
    return x_ncw + y2


if __name__ == "__main__":
    # Small shapes consistent with the module: dim=16 -> hidden=8 (compress=2),
    # T=256 so the tiled time axis (tT=128 -> 2 lane-dense tiles) exercises the
    # halo + roll edge-fix logic.
    B, dim, T = 2, 16, 256
    hidden = dim // 2

    key = jax.random.PRNGKey(0)
    k_x, k_w1, k_b1, k_w2, k_b2 = jax.random.split(key, 5)

    x = jax.random.normal(k_x, (B, dim, T), dtype=jnp.float32)
    # deterministic synthetic params (shapes from StreamableConv1d -> nn.Conv1d)
    w1 = 0.3 * jax.random.normal(k_w1, (hidden, dim, 3), dtype=jnp.float32)
    b1 = 0.1 * jax.random.normal(k_b1, (hidden,), dtype=jnp.float32)
    w2 = 0.3 * jax.random.normal(k_w2, (dim, hidden, 1), dtype=jnp.float32)
    b2 = 0.1 * jax.random.normal(k_b2, (dim,), dtype=jnp.float32)

    ref = jax.block_until_ready(_reference(x, w1, b1, w2, b2))

    # f32 I/O + f32 matmul path, forced small tile (exercises halo/tiling): tight check.
    out_f32 = jax.block_until_ready(
        seanet_resnet_block(x, w1, b1, w2, b2, time_tile=128,
                            compute_dtype=jnp.float32))
    assert out_f32.shape == (B, dim, T) and out_f32.dtype == jnp.float32
    assert jnp.allclose(out_f32, ref, atol=1e-5, rtol=1e-5), "f32 mismatch vs reference"

    # Native bf16 I/O + bf16 MXU (f32 accumulate / ELU / residual), auto tile: loose check.
    x_bf = x.astype(jnp.bfloat16)
    ref_bf = _reference(x_bf.astype(jnp.float32), w1, b1, w2, b2)
    out_bf = jax.block_until_ready(seanet_resnet_block(x_bf, w1, b1, w2, b2))
    assert out_bf.shape == (B, dim, T) and out_bf.dtype == jnp.bfloat16
    assert jnp.allclose(out_bf.astype(jnp.float32), ref_bf, atol=5e-2, rtol=5e-2), \
        "bf16 mismatch vs reference"

    print("KERNEL_OK")
</pallas_src>

<mosaic_0001>
module attributes {stable_mosaic.version = 11 : i64} {
  func.func @seanet_resblock_kernel(%arg0: i32, %arg1: i32, %arg2: memref<1x16x128xf32, #tpu.memory_space<vmem>>, %arg3: memref<1x1x16x2xf32, #tpu.memory_space<vmem>>, %arg4: memref<8x48xf32, #tpu.memory_space<vmem>>, %arg5: memref<8x1xf32, #tpu.memory_space<vmem>>, %arg6: memref<16x8xf32, #tpu.memory_space<vmem>>, %arg7: memref<16x1xf32, #tpu.memory_space<vmem>>, %arg8: memref<1x16x128xf32, #tpu.memory_space<vmem>>) attributes {dimension_semantics = [#tpu.dimension_semantics<parallel>, #tpu.dimension_semantics<parallel>], iteration_bounds = array<i64: 2, 2>, scalar_prefetch = 0 : i64, scratch_operands = 0 : i64, tpu.core_type = #tpu.core_type<tc>, window_params = [{transform_indices = @transform_0, window_bounds = array<i64: 1, 16, 128>}, {transform_indices = @transform_1, window_bounds = array<i64: 1, 1, 16, 2>}, {pipeline_mode = #tpu.pipeline_mode<synchronous>, transform_indices = @transform_2, window_bounds = array<i64: 8, 48>}, {pipeline_mode = #tpu.pipeline_mode<synchronous>, transform_indices = @transform_3, window_bounds = array<i64: 8, 1>}, {pipeline_mode = #tpu.pipeline_mode<synchronous>, transform_indices = @transform_4, window_bounds = array<i64: 16, 8>}, {pipeline_mode = #tpu.pipeline_mode<synchronous>, transform_indices = @transform_5, window_bounds = array<i64: 16, 1>}, {transform_indices = @transform_6, window_bounds = array<i64: 1, 16, 128>}]} {
    %c0 = arith.constant 0 : index
    %c0_0 = arith.constant 0 : index
    %c0_1 = arith.constant 0 : index
    %0 = vector.load %arg2[%c0, %c0_0, %c0_1] : memref<1x16x128xf32, #tpu.memory_space<vmem>>, vector<1x16x128xf32>
    %1 = vector.shape_cast %0 : vector<1x16x128xf32> to vector<16x128xf32>
    %cst = arith.constant 0.000000e+00 : f32
    %2 = vector.broadcast %cst : f32 to vector<16x128xf32>
    %3 = arith.cmpf ogt, %1, %2 : vector<16x128xf32>
    %4 = math.exp %1 : vector<16x128xf32>
    %cst_2 = arith.constant 1.000000e+00 : f32
    %5 = vector.broadcast %cst_2 : f32 to vector<16x128xf32>
    %6 = arith.subf %4, %5 : vector<16x128xf32>
    %cst_3 = arith.constant 1.000000e+00 : f32
    %7 = vector.broadcast %cst_3 : f32 to vector<16x128xf32>
    %8 = arith.mulf %7, %6 : vector<16x128xf32>
    %9 = arith.select %3, %1, %8 : vector<16x128xi1>, vector<16x128xf32>
    %c0_4 = arith.constant 0 : index
    %c0_5 = arith.constant 0 : index
    %c0_6 = arith.constant 0 : index
    %c0_7 = arith.constant 0 : index
    %10 = vector.load %arg3[%c0_4, %c0_5, %c0_6, %c0_7] : memref<1x1x16x2xf32, #tpu.memory_space<vmem>>, vector<1x1x16x2xf32>
    %11 = vector.shape_cast %10 : vector<1x1x16x2xf32> to vector<16x2xf32>
    %cst_8 = arith.constant 0.000000e+00 : f32
    %12 = vector.broadcast %cst_8 : f32 to vector<16x2xf32>
    %13 = arith.cmpf ogt, %11, %12 : vector<16x2xf32>
    %14 = math.exp %11 : vector<16x2xf32>
    %cst_9 = arith.constant 1.000000e+00 : f32
    %15 = vector.broadcast %cst_9 : f32 to vector<16x2xf32>
    %16 = arith.subf %14, %15 : vector<16x2xf32>
    %cst_10 = arith.constant 1.000000e+00 : f32
    %17 = vector.broadcast %cst_10 : f32 to vector<16x2xf32>
    %18 = arith.mulf %17, %16 : vector<16x2xf32>
    %19 = arith.select %13, %11, %18 : vector<16x2xi1>, vector<16x2xf32>
    %20 = vector.extract_strided_slice %19 {offsets = [0, 0], sizes = [16, 1], strides = [1, 1]} : vector<16x2xf32> to vector<16x1xf32>
    %21 = vector.extract_strided_slice %19 {offsets = [0, 1], sizes = [16, 1], strides = [1, 1]} : vector<16x2xf32> to vector<16x1xf32>
    %22 = tpu.iota {dimensions = array<i32: 1>} : vector<1x128xi32>
    %c0_i32 = arith.constant 0 : i32
    %23 = vector.broadcast %c0_i32 : i32 to vector<1x128xi32>
    %24 = arith.cmpi eq, %22, %23 : vector<1x128xi32>
    %c1_i32 = arith.constant 1 : i32
    %25 = tpu.dynamic_rotate %9 by %c1_i32 dim 1 : vector<16x128xf32>, i32 -> vector<16x128xf32>
    %26 = vector.shape_cast %24 : vector<1x128xi1> to vector<1x128xi1>
    %27 = vector.broadcast %26 : vector<1x128xi1> to vector<16x128xi1>
    %28 = vector.shape_cast %20 : vector<16x1xf32> to vector<16x1xf32>
    %29 = vector.broadcast %28 : vector<16x1xf32> to vector<16x128xf32>
    %30 = arith.select %27, %29, %25 : vector<16x128xi1>, vector<16x128xf32>
    %c127_i32 = arith.constant 127 : i32
    %31 = vector.broadcast %c127_i32 : i32 to vector<1x128xi32>
    %32 = arith.cmpi eq, %22, %31 : vector<1x128xi32>
    %c127_i32_11 = arith.constant 127 : i32
    %33 = tpu.dynamic_rotate %9 by %c127_i32_11 dim 1 : vector<16x128xf32>, i32 -> vector<16x128xf32>
    %34 = vector.shape_cast %32 : vector<1x128xi1> to vector<1x128xi1>
    %35 = vector.broadcast %34 : vector<1x128xi1> to vector<16x128xi1>
    %36 = vector.shape_cast %21 : vector<16x1xf32> to vector<16x1xf32>
    %37 = vector.broadcast %36 : vector<16x1xf32> to vector<16x128xf32>
    %38 = arith.select %35, %37, %33 : vector<16x128xi1>, vector<16x128xf32>
    %39 = tpu.concatenate %30, %9, %38 in 0 : vector<16x128xf32>, vector<16x128xf32>, vector<16x128xf32> -> vector<48x128xf32>
    %c0_12 = arith.constant 0 : index
    %c0_13 = arith.constant 0 : index
    %40 = vector.load %arg4[%c0_12, %c0_13] : memref<8x48xf32, #tpu.memory_space<vmem>>, vector<8x48xf32>
    %cst_14 = arith.constant dense<0.000000e+00> : vector<8x128xf32>
    %41 = tpu.matmul %40, %39, %cst_14 {dimension_numbers = #tpu.dot_dimension_numbers<[1], [0], [0], [1], [0, 0, 1, 1], [], []>} : vector<8x48xf32>, vector<48x128xf32>, vector<8x128xf32> -> vector<8x128xf32>
    %c0_15 = arith.constant 0 : index
    %c0_16 = arith.constant 0 : index
    %42 = vector.load %arg5[%c0_15, %c0_16] : memref<8x1xf32, #tpu.memory_space<vmem>>, vector<8x1xf32>
    %43 = vector.broadcast %42 : vector<8x1xf32> to vector<8x128xf32>
    %44 = arith.addf %41, %43 : vector<8x128xf32>
    %cst_17 = arith.constant 0.000000e+00 : f32
    %45 = vector.broadcast %cst_17 : f32 to vector<8x128xf32>
    %46 = arith.cmpf ogt, %44, %45 : vector<8x128xf32>
    %47 = math.exp %44 : vector<8x128xf32>
    %cst_18 = arith.constant 1.000000e+00 : f32
    %48 = vector.broadcast %cst_18 : f32 to vector<8x128xf32>
    %49 = arith.subf %47, %48 : vector<8x128xf32>
    %cst_19 = arith.constant 1.000000e+00 : f32
    %50 = vector.broadcast %cst_19 : f32 to vector<8x128xf32>
    %51 = arith.mulf %50, %49 : vector<8x128xf32>
    %52 = arith.select %46, %44, %51 : vector<8x128xi1>, vector<8x128xf32>
    %c0_20 = arith.constant 0 : index
    %c0_21 = arith.constant 0 : index
    %53 = vector.load %arg6[%c0_20, %c0_21] : memref<16x8xf32, #tpu.memory_space<vmem>>, vector<16x8xf32>
    %cst_22 = arith.constant dense<0.000000e+00> : vector<16x128xf32>
    %54 = tpu.matmul %53, %52, %cst_22 {dimension_numbers = #tpu.dot_dimension_numbers<[1], [0], [0], [1], [0, 0, 1, 1], [], []>} : vector<16x8xf32>, vector<8x128xf32>, vector<16x128xf32> -> vector<16x128xf32>
    %c0_23 = arith.constant 0 : index
    %c0_24 = arith.constant 0 : index
    %55 = vector.load %arg7[%c0_23, %c0_24] : memref<16x1xf32, #tpu.memory_space<vmem>>, vector<16x1xf32>
    %56 = vector.broadcast %55 : vector<16x1xf32> to vector<16x128xf32>
    %57 = arith.addf %54, %56 : vector<16x128xf32>
    %58 = arith.addf %1, %57 : vector<16x128xf32>
    %c0_25 = arith.constant 0 : index
    %c0_26 = arith.constant 0 : index
    %c0_27 = arith.constant 0 : index
    %59 = vector.load %arg8[%c0_25, %c0_26, %c0_27] : memref<1x16x128xf32, #tpu.memory_space<vmem>>, vector<1x16x128xf32>
    %60 = vector.shape_cast %59 : vector<1x16x128xf32> to vector<16x128xf32>
    %61 = vector.shape_cast %58 : vector<16x128xf32> to vector<1x16x128xf32>
    tpu.vector_store %arg8[%c0_25, %c0_26, %c0_27], %61 {strides = array<i32>} : memref<1x16x128xf32, #tpu.memory_space<vmem>>, vector<1x16x128xf32>,
    return
  }
  func.func @transform_0(%arg0: i32, %arg1: i32) -> (i32, i32, i32) {
    %c0_i32 = arith.constant 0 : i32
    %c0_i32_0 = arith.constant 0 : i32
    return %arg0, %c0_i32, %arg1 : i32, i32, i32
  }
  func.func @transform_1(%arg0: i32, %arg1: i32) -> (i32, i32, i32, i32) {
    %c0_i32 = arith.constant 0 : i32
    %c0_i32_0 = arith.constant 0 : i32
    %c0_i32_1 = arith.constant 0 : i32
    return %arg0, %arg1, %c0_i32, %c0_i32_0 : i32, i32, i32, i32
  }
  func.func @transform_2(%arg0: i32, %arg1: i32) -> (i32, i32) {
    %c0_i32 = arith.constant 0 : i32
    %c0_i32_0 = arith.constant 0 : i32
    %c0_i32_1 = arith.constant 0 : i32
    return %c0_i32, %c0_i32_0 : i32, i32
  }
  func.func @transform_3(%arg0: i32, %arg1: i32) -> (i32, i32) {
    %c0_i32 = arith.constant 0 : i32
    %c0_i32_0 = arith.constant 0 : i32
    %c0_i32_1 = arith.constant 0 : i32
    return %c0_i32, %c0_i32_0 : i32, i32
  }
  func.func @transform_4(%arg0: i32, %arg1: i32) -> (i32, i32) {
    %c0_i32 = arith.constant 0 : i32
    %c0_i32_0 = arith.constant 0 : i32
    %c0_i32_1 = arith.constant 0 : i32
    return %c0_i32, %c0_i32_0 : i32, i32
  }
  func.func @transform_5(%arg0: i32, %arg1: i32) -> (i32, i32) {
    %c0_i32 = arith.constant 0 : i32
    %c0_i32_0 = arith.constant 0 : i32
    %c0_i32_1 = arith.constant 0 : i32
    return %c0_i32, %c0_i32_0 : i32, i32
  }
  func.func @transform_6(%arg0: i32, %arg1: i32) -> (i32, i32, i32) {
    %c0_i32 = arith.constant 0 : i32
    %c0_i32_0 = arith.constant 0 : i32
    return %arg0, %c0_i32, %arg1 : i32, i32, i32
  }
}

</mosaic_0001>

<llo_original>
// kernel: tpu_custom_call.1
$region0: #{tpu_custom_call.1}
  #allocation0 [shape = 'u32[]', space=smem, size = 0x4, offset = 0x4, fixed_abs, tag = 'smem constant byte address 0x4 - core index']
  #allocation1 [shape = 'u32[144,128]{1,0:T(1,128)}', space=vmem, size = 0x12000, scoped, tag = 'internal scratch']
  %s0 = inlined_call_operand.vmem [shape: f32[2,16,256], index: 0, kind: input, shape index: {}]
  %s1 = inlined_call_operand.vmem [shape: f32[2,2,16,2], index: 1, kind: input, shape index: {}]
  %s2 = inlined_call_operand.vmem [shape: f32[8,48], index: 2, kind: input, shape index: {}]
  %s3 = inlined_call_operand.vmem [shape: f32[8,1], index: 3, kind: input, shape index: {}]
  %s4 = inlined_call_operand.vmem [shape: f32[16,8], index: 4, kind: input, shape index: {}]
  %s5 = inlined_call_operand.vmem [shape: f32[16,1], index: 5, kind: input, shape index: {}]
  %s6 = inlined_call_operand.hbm [shape: f32[2,16,256], index: 6, kind: output, shape index: {}]
  %s7 = sld [smem:[#allocation0]]
  $region95: #{tpu_custom_call.1} parent=0
    _
  %s9 = ssub.s32 1, %s7
  %s10 = scalar_select 0, %s9, %s7
  $region1: #{tpu_custom_call.1} parent=0
    #allocation2 [shape = 'u8[16384]{0}', space=vmem, size = 0x4000, scoped, tag = 'input window, operand 0']
    #allocation3 [shape = 'u8[16384]{0}', space=vmem, size = 0x4000, scoped, tag = 'output window, operand 0']
    #allocation4 [shape = 's32[2]{0}', space=sflag, size = 0x8, scoped, tag = 'scoped memory for tpu_custom_call.1']
    %11 = vsyncpa [#allocation4], 0
    %s12 = scalar_lea.sflag [#allocation4], 1
    %13 = vsyncpa %s12, 0
    loop: start=0, step=1, limit=6
    $region2: #{tpu_custom_call.1} parent=1 // loop_pre_header
      _
    $region3: #{tpu_custom_call.1} parent=1 // loop_header
      %s15 = sphi 0, %s19
      %p16 = scmp.ge.s32.totalorder %s15, 6
      %s22 = sphi 0, %s34
      %s23 = sphi 0, %s30
      %s24 = sphi 0, %s22
      %s25 = sphi 0, %s23
      %s26 = sphi 0, %s24
      %s27 = sphi 0, %s25
      %s39 = sphi 0, %s41
      %s42 = sphi 0, %s39
      %s43 = sphi 0, %s42
      %s59 = sphi 0, %s43
      %s67 = sphi 0, %s69
      %s70 = sphi 0, %s67
      %s71 = sphi 0, %s70
      %s87 = sphi 0, %s71
      %s91 = sphi 0, %s91
      %s93 = sphi 0, %s91
      %s94 = sphi 0, %s93
      %s108 = sphi 0, %s94
      %s112 = sphi 0, %s112
      %s114 = sphi 0, %s112
      %s115 = sphi 0, %s114
      %s129 = sphi 0, %s115
      %s133 = sphi 0, %s133
      %s135 = sphi 0, %s133
      %s136 = sphi 0, %s135
      %s150 = sphi 0, %s136
      %s154 = sphi 0, %s154
      %s156 = sphi 0, %s154
      %s157 = sphi 0, %s156
      %s171 = sphi 0, %s157
      %s179 = sphi 0, %s181
      %s182 = sphi 0, %s179
      %s183 = sphi 0, %s182
      %s199 = sphi 0, %s183
    $region4: #{tpu_custom_call.1} parent=1 // loop_header_branch
      %18 = sbr.rel (%p16) target = $region8
    $region5: #{tpu_custom_call.1} parent=1 // loop_body
      %s20 = ssub.s32 %s15, 1
      %s21 = ssub.s32 %s15, 2
      %s28 = sadd.s32 1, %s23
      %p29 = scmp.ge.s32.totalorder %s28, 2
      %s30 = scalar_select %p29, 0, %s28
      %s31 = sadd.s32 1, %s22
      %s32 = scalar_select %p29, %s31, %s22
      %p33 = scmp.ge.s32.totalorder %s32, 2
      %s34 = scalar_select %p33, 0, %s32
      %s35 = ssub.s32 %s22, %s34
      %s36 = ssub.s32 %s23, %s30
      %s37 = sor.u32 %s35, %s36
      %p38 = scmp.eq.s32.totalorder %s37, 0
      %s40 = sadd.s32 %s39, 1
      %s41 = scalar_select %p38, %s39, %s40
      %p44 = pneg %p38
      %p45 = scmp.eq.s32.totalorder %s15, 3
      %p46 = por %p44, %p45
      %p47 = scmp.ne.s32.totalorder %s39, %s42
      %p48 = scmp.eq.s32.totalorder %s15, 0
      %p49 = por %p47, %p48
      %p50 = scmp.ne.s32.totalorder %s39, %s42
      %p51 = scmp.eq.s32.totalorder %s20, 3
      %p52 = por %p50, %p51
      %p53 = scmp.ne.s32.totalorder %s42, %s43
      %p54 = scmp.eq.s32.totalorder %s20, 0
      %p55 = por %p53, %p54
      %p56 = scmp.ne.s32.totalorder %s42, %s43
      %p57 = scmp.eq.s32.totalorder %s21, 3
      %p58 = por %p56, %p57
      %p60 = scmp.ne.s32.totalorder %s43, %s59
      %p61 = scmp.eq.s32.totalorder %s21, 0
      %p62 = por %p60, %p61
      %s63 = ssub.s32 %s22, %s34
      %s64 = ssub.s32 %s23, %s30
      %s65 = sor.u32 %s63, %s64
      %p66 = scmp.eq.s32.totalorder %s65, 0
      %s68 = sadd.s32 %s67, 1
      %s69 = scalar_select %p66, %s67, %s68
      %p72 = pneg %p66
      %p73 = scmp.eq.s32.totalorder %s15, 3
      %p74 = por %p72, %p73
      %p75 = scmp.ne.s32.totalorder %s67, %s70
      %p76 = scmp.eq.s32.totalorder %s15, 0
      %p77 = por %p75, %p76
      %p78 = scmp.ne.s32.totalorder %s67, %s70
      %p79 = scmp.eq.s32.totalorder %s20, 3
      %p80 = por %p78, %p79
      %p81 = scmp.ne.s32.totalorder %s70, %s71
      %p82 = scmp.eq.s32.totalorder %s20, 0
      %p83 = por %p81, %p82
      %p84 = scmp.ne.s32.totalorder %s70, %s71
      %p85 = scmp.eq.s32.totalorder %s21, 3
      %p86 = por %p84, %p85
      %p88 = scmp.ne.s32.totalorder %s71, %s87
      %p89 = scmp.eq.s32.totalorder %s21, 0
      %p90 = por %p88, %p89
      %s92 = sadd.s32 %s91, 1
      %p95 = scmp.eq.s32.totalorder %s15, 3
      %p96 = scmp.ne.s32.totalorder %s91, %s93
      %p97 = scmp.eq.s32.totalorder %s15, 0
      %p98 = por %p96, %p97
      %p99 = scmp.ne.s32.totalorder %s91, %s93
      %p100 = scmp.eq.s32.totalorder %s20, 3
      %p101 = por %p99, %p100
      %p102 = scmp.ne.s32.totalorder %s93, %s94
      %p103 = scmp.eq.s32.totalorder %s20, 0
      %p104 = por %p102, %p103
      %p105 = scmp.ne.s32.totalorder %s93, %s94
      %p106 = scmp.eq.s32.totalorder %s21, 3
      %p107 = por %p105, %p106
      %p109 = scmp.ne.s32.totalorder %s94, %s108
      %p110 = scmp.eq.s32.totalorder %s21, 0
      %p111 = por %p109, %p110
      %s113 = sadd.s32 %s112, 1
      %p116 = scmp.eq.s32.totalorder %s15, 3
      %p117 = scmp.ne.s32.totalorder %s112, %s114
      %p118 = scmp.eq.s32.totalorder %s15, 0
      %p119 = por %p117, %p118
      %p120 = scmp.ne.s32.totalorder %s112, %s114
      %p121 = scmp.eq.s32.totalorder %s20, 3
      %p122 = por %p120, %p121
      %p123 = scmp.ne.s32.totalorder %s114, %s115
      %p124 = scmp.eq.s32.totalorder %s20, 0
      %p125 = por %p123, %p124
      %p126 = scmp.ne.s32.totalorder %s114, %s115
      %p127 = scmp.eq.s32.totalorder %s21, 3
      %p128 = por %p126, %p127
      %p130 = scmp.ne.s32.totalorder %s115, %s129
      %p131 = scmp.eq.s32.totalorder %s21, 0
      %p132 = por %p130, %p131
      %s134 = sadd.s32 %s133, 1
      %p137 = scmp.eq.s32.totalorder %s15, 3
      %p138 = scmp.ne.s32.totalorder %s133, %s135
      %p139 = scmp.eq.s32.totalorder %s15, 0
      %p140 = por %p138, %p139
      %p141 = scmp.ne.s32.totalorder %s133, %s135
      %p142 = scmp.eq.s32.totalorder %s20, 3
      %p143 = por %p141, %p142
      %p144 = scmp.ne.s32.totalorder %s135, %s136
      %p145 = scmp.eq.s32.totalorder %s20, 0
      %p146 = por %p144, %p145
      %p147 = scmp.ne.s32.totalorder %s135, %s136
      %p148 = scmp.eq.s32.totalorder %s21, 3
      %p149 = por %p147, %p148
      %p151 = scmp.ne.s32.totalorder %s136, %s150
      %p152 = scmp.eq.s32.totalorder %s21, 0
      %p153 = por %p151, %p152
      %s155 = sadd.s32 %s154, 1
      %p158 = scmp.eq.s32.totalorder %s15, 3
      %p159 = scmp.ne.s32.totalorder %s154, %s156
      %p160 = scmp.eq.s32.totalorder %s15, 0
      %p161 = por %p159, %p160
      %p162 = scmp.ne.s32.totalorder %s154, %s156
      %p163 = scmp.eq.s32.totalorder %s20, 3
      %p164 = por %p162, %p163
      %p165 = scmp.ne.s32.totalorder %s156, %s157
      %p166 = scmp.eq.s32.totalorder %s20, 0
      %p167 = por %p165, %p166
      %p168 = scmp.ne.s32.totalorder %s156, %s157
      %p169 = scmp.eq.s32.totalorder %s21, 3
      %p170 = por %p168, %p169
      %p172 = scmp.ne.s32.totalorder %s157, %s171
      %p173 = scmp.eq.s32.totalorder %s21, 0
      %p174 = por %p172, %p173
      %s175 = ssub.s32 %s22, %s34
      %s176 = ssub.s32 %s23, %s30
      %s177 = sor.u32 %s175, %s176
      %p178 = scmp.eq.s32.totalorder %s177, 0
      %s180 = sadd.s32 %s179, 1
      %s181 = scalar_select %p178, %s179, %s180
      %p184 = pneg %p178
      %p185 = scmp.eq.s32.totalorder %s15, 3
      %p186 = por %p184, %p185
      %p187 = scmp.ne.s32.totalorder %s179, %s182
      %p188 = scmp.eq.s32.totalorder %s15, 0
      %p189 = por %p187, %p188
      %p190 = scmp.ne.s32.totalorder %s179, %s182
      %p191 = scmp.eq.s32.totalorder %s20, 3
      %p192 = por %p190, %p191
      %p193 = scmp.ne.s32.totalorder %s182, %s183
      %p194 = scmp.eq.s32.totalorder %s20, 0
      %p195 = por %p193, %p194
      %p196 = scmp.ne.s32.totalorder %s182, %s183
      %p197 = scmp.eq.s32.totalorder %s21, 3
      %p198 = por %p196, %p197
      %p200 = scmp.ne.s32.totalorder %s183, %s199
      %p201 = scmp.eq.s32.totalorder %s21, 0
      %p202 = por %p200, %p201
      %p203 = scmp.le.s32.totalorder 1, %s15
      %p204 = scmp.lt.s32.totalorder %s15, 5
      %p205 = pnand %p203, %p204
      %p206 = pneg %p205
      // Predicated region
      $region9: #{tpu_custom_call.1} parent=5 // pred_check
        _
      $region10: #{tpu_custom_call.1} parent=5 // pred_check_branch
        %208 = sbr.rel (%p205) target = $region12
      $region11: #{tpu_custom_call.1} parent=5 // pred_region
        %s209 = ssub.s32 %s15, 1
        // Predicated region
        $region13: #{tpu_custom_call.1} parent=11 // pred_check
          %p210 = pneg %p104
        $region14: #{tpu_custom_call.1} parent=11 // pred_check_branch
          %212 = sbr.rel (%p210) target = $region16
        $region15: #{tpu_custom_call.1} parent=11 // pred_region
          _
        $region16: #{tpu_custom_call.1} parent=11 // pred_fallthru
          _
        // Predicated region
        $region17: #{tpu_custom_call.1} parent=11 // pred_check
          %p213 = pneg %p125
        $region18: #{tpu_custom_call.1} parent=11 // pred_check_branch
          %215 = sbr.rel (%p213) target = $region20
        $region19: #{tpu_custom_call.1} parent=11 // pred_region
          _
        $region20: #{tpu_custom_call.1} parent=11 // pred_fallthru
          _
        // Predicated region
        $region21: #{tpu_custom_call.1} parent=11 // pred_check
          %p216 = pneg %p146
        $region22: #{tpu_custom_call.1} parent=11 // pred_check_branch
          %218 = sbr.rel (%p216) target = $region24
        $region23: #{tpu_custom_call.1} parent=11 // pred_region
          _
        $region24: #{tpu_custom_call.1} parent=11 // pred_fallthru
          _
        // Predicated region
        $region25: #{tpu_custom_call.1} parent=11 // pred_check
          %p219 = pneg %p167
        $region26: #{tpu_custom_call.1} parent=11 // pred_check_branch
          %221 = sbr.rel (%p219) target = $region28
        $region27: #{tpu_custom_call.1} parent=11 // pred_region
          _
        $region28: #{tpu_custom_call.1} parent=11 // pred_fallthru
          _
      $region12: #{tpu_custom_call.1} parent=5 // pred_fallthru
        _
      %p222 = scmp.lt.s32.totalorder %s15, 4
      // Predicated region
      $region29: #{tpu_custom_call.1} parent=5 // pred_check
        %p223 = pneg %p222
      $region30: #{tpu_custom_call.1} parent=5 // pred_check_branch
        %225 = sbr.rel (%p223) target = $region32
      $region31: #{tpu_custom_call.1} parent=5 // pred_region
        // Predicated region
        $region33: #{tpu_custom_call.1} parent=31 // pred_check
          %p226 = pneg %p49
        $region34: #{tpu_custom_call.1} parent=31 // pred_check_branch
          %228 = sbr.rel (%p226) target = $region36
        $region35: #{tpu_custom_call.1} parent=31 // pred_region
          %s229 = sand.u32 %s39, 1
          %s230 = sand.u32 %s39, 1
          %s231 = smul.addr %s230, 16
          %s232 = scalar_lea.vmem [#allocation2], %s231
          %s233 = smul.addr %s22, 4
          %s234 = sadd.s32 %s23, %s233
          %s235 = smul.addr %s234, 8
          %s236 = scalar_lea.vmem %s0, %s235
          // Predicated region
          $region37: #{tpu_custom_call.1} parent=35 // pred_check
            _
          $region38: #{tpu_custom_call.1} parent=35 // pred_check_branch
            %238 = sbr.rel (0) target = $region40
          $region39: #{tpu_custom_call.1} parent=35 // pred_region
            // Predicated region
            $region41: #{tpu_custom_call.1} parent=39 // pred_check
              _
            $region42: #{tpu_custom_call.1} parent=39 // pred_check_branch
              %240 = sbr.rel (0) target = $region44
            $region43: #{tpu_custom_call.1} parent=39 // pred_region
              // Predicated region
              $region56: #{tpu_custom_call.1} parent=43 // pred_check
                _
              $region57: #{tpu_custom_call.1} parent=43 // pred_check_branch
                %257 = sbr.rel (0) target = $region59
              $region58: #{tpu_custom_call.1} parent=43 // pred_region
                loop: start=0, step=1, limit=1
                $region60: #{tpu_custom_call.1} parent=58 // loop_pre_header
                  _
                $region61: #{tpu_custom_call.1} parent=58 // loop_header
                  %s259 = sphi 0, %s263
                  %p260 = scmp.ge.s32.totalorder %s259, 1
                  %s264 = sphi %s236, %s236
                  %s265 = sphi %s232, %s232
                $region62: #{tpu_custom_call.1} parent=58 // loop_header_branch
                  %262 = sbr.rel (%p260) target = $region66
                $region63: #{tpu_custom_call.1} parent=58 // loop_body
                  %v266 = vld [vmem:[%s264] sm:$0xff]
                  %267 = vst [vmem:[%s265] sm:$0xff] %v266
                  %v268 = vld [vmem:[%s264 + $0x10] sm:$0xff]
                  %269 = vst [vmem:[%s265 + $0x8] sm:$0xff] %v268
                $region64: #{tpu_custom_call.1} parent=58 // loop_footer
                  %s263 = sadd.s32 1, %s259
                $region65: #{tpu_custom_call.1} parent=58 // loop_footer_branch
                  %258 = sbr.rel target = $region61
                $region66: #{tpu_custom_call.1} parent=58 // loop_exit
                  _
              $region59: #{tpu_custom_call.1} parent=43 // pred_fallthru
                _
              // Predicated region
              $region67: #{tpu_custom_call.1} parent=43 // pred_check
                _
              $region68: #{tpu_custom_call.1} parent=43 // pred_check_branch
                %271 = sbr.rel target = $region70
              $region69: #{tpu_custom_call.1} parent=43 // pred_region
                _
              $region70: #{tpu_custom_call.1} parent=43 // pred_fallthru
                _
            $region44: #{tpu_custom_call.1} parent=39 // pred_fallthru
              _
            // Predicated region
            $region45: #{tpu_custom_call.1} parent=39 // pred_check
              _
            $region46: #{tpu_custom_call.1} parent=39 // pred_check_branch
              %242 = sbr.rel target = $region48
            $region47: #{tpu_custom_call.1} parent=39 // pred_region
              loop: start=0, step=1, limit=1
              $region49: #{tpu_custom_call.1} parent=47 // loop_pre_header
                _
              $region50: #{tpu_custom_call.1} parent=47 // loop_header
                %s245 = sphi 0, %s249
                %p246 = scmp.ge.s32.totalorder %s245, 1
                %s250 = sphi %s236, %s236
                %s251 = sphi %s232, %s232
              $region51: #{tpu_custom_call.1} parent=47 // loop_header_branch
                %248 = sbr.rel (%p246) target = $region55
              $region52: #{tpu_custom_call.1} parent=47 // loop_body
                %v252 = vld [vmem:[%s250] sm:$0xff]
                %253 = vst [vmem:[%s251] sm:$0xff] %v252
                %v254 = vld [vmem:[%s250 + $0x10] sm:$0xff]
                %255 = vst [vmem:[%s251 + $0x8] sm:$0xff] %v254
              $region53: #{tpu_custom_call.1} parent=47 // loop_footer
                %s249 = sadd.s32 1, %s245
              $region54: #{tpu_custom_call.1} parent=47 // loop_footer_branch
                %244 = sbr.rel target = $region50
              $region55: #{tpu_custom_call.1} parent=47 // loop_exit
                _
            $region48: #{tpu_custom_call.1} parent=39 // pred_fallthru
              _
          $region40: #{tpu_custom_call.1} parent=35 // pred_fallthru
            _
          %272 = vnop
        $region36: #{tpu_custom_call.1} parent=31 // pred_fallthru
          _
        // Predicated region
        $region71: #{tpu_custom_call.1} parent=31 // pred_check
          %p273 = pneg %p77
        $region72: #{tpu_custom_call.1} parent=31 // pred_check_branch
          %275 = sbr.rel (%p273) target = $region74
        $region73: #{tpu_custom_call.1} parent=31 // pred_region
          %p276 = scmp.lt.s32.totalorder %s22, 1
          %s277 = scalar_select %p276, %s22, 1
          %p278 = scmp.lt.s32.totalorder %s23, 1
          %s279 = scalar_select %p278, %s23, 1
          %s280 = smul.addr %s279, 2
          %s281 = smul.addr %s277, 4
          %s282 = sadd.s32 %s280, %s281
          %s283 = smul.addr %s282, 8
          %s284 = scalar_lea.vmem %s1, %s283
        $region74: #{tpu_custom_call.1} parent=31 // pred_fallthru
          _
      $region32: #{tpu_custom_call.1} parent=5 // pred_fallthru
        _
      %p285 = scmp.le.s32.totalorder 1, %s15
      %p286 = scmp.lt.s32.totalorder %s15, 5
      %p287 = pnand %p285, %p286
      %p288 = pneg %p287
      // Predicated region
      $region75: #{tpu_custom_call.1} parent=5 // pred_check
        _
      $region76: #{tpu_custom_call.1} parent=5 // pred_check_branch
        %290 = sbr.rel (%p287) target = $region78
      $region77: #{tpu_custom_call.1} parent=5 // pred_region
        %s291 = ssub.s32 %s15, 1
        %s292 = sand.u32 %s42, 1
        %s293 = sand.u32 %s42, 1
        %s294 = smul.addr %s293, 16
        %s295 = scalar_lea.vmem [#allocation2], %s294
        // Predicated region
        $region79: #{tpu_custom_call.1} parent=77 // pred_check
          %p296 = pneg %p55
        $region80: #{tpu_custom_call.1} parent=77 // pred_check_branch
          %298 = sbr.rel (%p296) target = $region82
        $region81: #{tpu_custom_call.1} parent=77 // pred_region
          _
        $region82: #{tpu_custom_call.1} parent=77 // pred_fallthru
          _
        %s299 = sand.u32 %s42, 1
        %s300 = sand.u32 %s42, 1
        %s301 = smul.addr %s300, 16
        %s302 = scalar_lea.vmem [#allocation2], %s301
        %p303 = pneg %p55
        %p304 = pneg %p52
        %p305 = scmp.lt.s32.totalorder %s24, 1
        %s306 = scalar_select %p305, %s24, 1
        %p307 = scmp.lt.s32.totalorder %s25, 1
        %s308 = scalar_select %p307, %s25, 1
        %s309 = smul.addr %s308, 2
        %s310 = smul.addr %s306, 4
        %s311 = sadd.s32 %s309, %s310
        %s312 = smul.addr %s311, 8
        %s313 = scalar_lea.vmem %s1, %s312
        %p314 = pneg %p83
        %p315 = pneg %p80
        %p316 = pneg %p104
        %p317 = pneg %p101
        %p318 = pneg %p125
        %p319 = pneg %p122
        %p320 = pneg %p146
        %p321 = pneg %p143
        %p322 = pneg %p167
        %p323 = pneg %p164
        %p324 = pneg %p195
        %p325 = pneg %p192
        %s326 = sand.u32 %s182, 1
        %s327 = scalar_lea.sflag [#allocation4], %s326
        %s328 = sand.u32 %s182, 1
        %s329 = smul.addr %s328, 16
        %s330 = scalar_lea.vmem [#allocation3], %s329
        %p331 = scmp.lt.s32.totalorder %s24, 1
        %s332 = scalar_select %p331, %s24, 1
        %p333 = scmp.lt.s32.totalorder %s25, 1
        %s334 = scalar_select %p333, %s25, 1
        %s335 = smul.addr %s334, 2
        %s336 = smul.addr %s332, 4
        %s337 = sadd.s32 %s335, %s336
        %s338 = smul.addr %s337, 8
        %s339 = scalar_lea.vmem %s1, %s338
        %v340 = vld [vmem:[%s295] sm:$0xff]
        %v341 = vld [vmem:[%s295 + $0x8] sm:$0xff]
        %vm342 = vcmp.gt.f32.partialorder %v340, 0.0
        %vm343 = vcmp.gt.f32.partialorder %v341, 0.0
        %v344 = vmul.f32 %v340, 1.442695
        %v345 = vpow.pop %v344
        %v346 = vmul.f32 %v341, 1.442695
        %v347 = vpow.pop %v346
        %v348 = vsub.f32 %v345, 1.0
        %v349 = vsub.f32 %v347, 1.0
        %v350 = vsel %vm342, %v340, %v348
        %v351 = vsel %vm343, %v341, %v349
        %v352 = vld [vmem:[%s339] sm:$0xff]
        %v353 = vld [vmem:[%s339 + $0x8] sm:$0xff]
        %vm354 = vcmp.gt.f32.partialorder %v352, 0.0
        %vm355 = vcmp.gt.f32.partialorder %v353, 0.0
        %v356 = vmul.f32 %v352, 1.442695
        %v357 = vpow.pop %v356
        %v358 = vmul.f32 %v353, 1.442695
        %v359 = vpow.pop %v358
        %v360 = vsub.f32 %v357, 1.0
        %v361 = vsub.f32 %v359, 1.0
        %v362 = vsel %vm354, %v352, %v360
        %v363 = vsel %vm355, %v353, %v361
        %v364 = vlaneseq
        %v365 = vand.u32 %v364, 127
        %vm366 = vcmp.eq.s32.totalorder %v365, 0
        %367 = vrot.lane.b32.xlu0 %v350, 1
        %v368 = vpop.permute.xlu0 %367
        %369 = vrot.lane.b32.xlu0 %v351, 1
        %v370 = vpop.permute.xlu0 %369
        %v371 = vsel %vm366, 1, 0
        %vm372 = vcmp.eq.s32.totalorder %v371, 1
        %374 = vset.pattern.permute.xlu0 0
        %375 = vperm.xlu0 %374, %v362
        %v376 = vpop.permute.xlu0 %375
        %379 = vset.pattern.permute.xlu0 0
        %380 = vperm.xlu0 %379, %v363
        %v381 = vpop.permute.xlu0 %380
        %v383 = vsel %vm372, %v376, %v368
        %v384 = vsel %vm372, %v381, %v370
        %vm385 = vcmp.eq.s32.totalorder %v365, 127
        %386 = vrot.lane.b32.xlu0 %v350, 127
        %v387 = vpop.permute.xlu0 %386
        %388 = vrot.lane.b32.xlu0 %v351, 127
        %v389 = vpop.permute.xlu0 %388
        %v390 = vsel %vm385, 1, 0
        %vm391 = vcmp.eq.s32.totalorder %v390, 1
        %392 = vset.pattern.permute.xlu0 1
        %393 = vperm.xlu0 %392, %v362
        %v394 = vpop.permute.xlu0 %393
        %396 = vset.pattern.permute.xlu0 1
        %397 = vperm.xlu0 %396, %v363
        %v398 = vpop.permute.xlu0 %397
        %v400 = vsel %vm391, %v394, %v387
        %v401 = vsel %vm391, %v398, %v389
        %v402 = vld [vmem:[%s2] sm:$0xff]
        %v403 = vld [vmem:[%s3] sm:$0xff]
        %405 = vset.pattern.permute.xlu0 0
        %406 = vperm.xlu0 %405, %v403
        %v407 = vpop.permute.xlu0 %406
        %vm409 = vcmask 392192
        %v411 = vsel %vm409, %v402, 0
        %413 = vmatprep.subr.mxu0 0.0
        %414 = vmatpush1.msra.mxu0 %v383
        %415 = vmatprep.subr.mxu0 0.0
        %416 = vmatpush1.msra.mxu0 %v384
        %417 = vmatprep.subr.mxu0 0.0
        %418 = vmatpush1.msra.mxu0 %v350
        %419 = vmatprep.subr.mxu0 0.0
        %420 = vmatpush1.msra.mxu0 %v351
        %421 = vmatprep.subr.mxu0 0.0
        %422 = vmatpush1.msra.mxu0 %v400
        %423 = vmatprep.subr.mxu0 0.0
        %424 = vmatpush1.msra.mxu0 %v401
        %425 = vmatprep.subr.mxu0 0.0
        %426 = vmatpush1.msra.mxu0 0.0
        %427 = vmatprep.subr.mxu0 0.0
        %428 = vmatpush1.msra.mxu0 0.0
        %429 = vmatprep.subr.mxu0 0.0
        %430 = vmatpush1.msra.mxu0 0.0
        %431 = vmatprep.subr.mxu0 0.0
        %432 = vmatpush1.msra.mxu0 0.0
        %433 = vmatprep.subr.mxu0 0.0
        %434 = vmatpush1.msra.mxu0 0.0
        %435 = vmatprep.subr.mxu0 0.0
        %436 = vmatpush1.msra.mxu0 0.0
        %437 = vmatprep.subr.mxu0 0.0
        %438 = vmatpush1.msra.mxu0 0.0
        %439 = vmatprep.subr.mxu0 0.0
        %440 = vmatpush1.msra.mxu0 0.0
        %441 = vmatprep.subr.mxu0 0.0
        %442 = vmatpush1.msra.mxu0 0.0
        %443 = vmatprep.subr.mxu0 0.0
        %444 = vmatpush1.msra.mxu0 0.0
        %445 = vmatprep.subr.mxu0 0.0
        %446 = vmatpush1.msra.mxu0 0.0
        %447 = vmatprep.subr.mxu0 0.0
        %448 = vmatpush1.msra.mxu0 0.0
        %449 = vmatprep.subr.mxu0 0.0
        %450 = vmatpush1.msra.mxu0 0.0
        %451 = vmatprep.subr.mxu0 0.0
        %452 = vmatpush1.msra.mxu0 0.0
        %453 = vmatprep.subr.mxu0 0.0
        %454 = vmatpush1.msra.mxu0 0.0
        %455 = vmatprep.subr.mxu0 0.0
        %456 = vmatpush1.msra.mxu0 0.0
        %457 = vmatprep.subr.mxu0 0.0
        %458 = vmatpush1.msra.mxu0 0.0
        %459 = vmatprep.subr.mxu0 0.0
        %460 = vmatpush1.msra.mxu0 0.0
        %461 = vmatprep.subr.mxu0 0.0
        %462 = vmatpush1.msra.mxu0 0.0
        %463 = vmatprep.subr.mxu0 0.0
        %464 = vmatpush1.msra.mxu0 0.0
        %465 = vmatprep.subr.mxu0 0.0
        %466 = vmatpush1.msra.mxu0 0.0
        %467 = vmatprep.subr.mxu0 0.0
        %468 = vmatpush1.msra.mxu0 0.0
        %469 = vmatprep.subr.mxu0 0.0
        %470 = vmatpush1.msra.mxu0 0.0
        %471 = vmatprep.subr.mxu0 0.0
        %472 = vmatpush1.msra.mxu0 0.0
        %473 = vmatprep.subr.mxu0 0.0
        %474 = vmatpush1.msra.mxu0 0.0
        %475 = vmatprep.subr.mxu0 0.0
        %476 = vmatpush1.msra.mxu0 0.0
        %477 = vmatprep.mubr.f32.mxu0 0.0
        %478 = vmatmul.mubr.f32.gmra.mrb[0].mxu0 %v411
        %v479 = vpop.f32.mrb[0].mxu0
        %v480 = vadd.f32 %v407, %v479
        %v481 = vpop.f32.mrb[0].mxu0
        %482 = vdwg.mxu0
        %vm483 = vcmp.gt.f32.partialorder %v480, 0.0
        %v484 = vmul.f32 %v480, 1.442695
        %v485 = vpow.pop %v484
        %v486 = vsub.f32 %v485, 1.0
        %v487 = vsel %vm483, %v480, %v486
        %v488 = vld [vmem:[%s4] sm:$0xff]
        %v489 = vld [vmem:[%s4 + $0x8] sm:$0xff]
        %v490 = vld [vmem:[%s5] sm:$0xff]
        %v491 = vld [vmem:[%s5 + $0x8] sm:$0xff]
        %493 = vset.pattern.permute.xlu0 0
        %494 = vperm.xlu0 %493, %v490
        %v495 = vpop.permute.xlu0 %494
        %498 = vset.pattern.permute.xlu0 0
        %499 = vperm.xlu0 %498, %v491
        %v500 = vpop.permute.xlu0 %499
        %vm502 = vcmask 64512
        %v504 = vsel %vm502, %v488, 0
        %v507 = vsel %vm502, %v489, 0
        %509 = vmatprep.subr.mxu0 0.0
        %510 = vmatpush1.msra.mxu0 %v487
        %511 = vmatprep.subr.mxu0 0.0
        %512 = vmatpush1.msra.mxu0 0.0
        %513 = vmatprep.subr.mxu0 0.0
        %514 = vmatpush1.msra.mxu0 0.0
        %515 = vmatprep.subr.mxu0 0.0
        %516 = vmatpush1.msra.mxu0 0.0
        %517 = vmatprep.subr.mxu0 0.0
        %518 = vmatpush1.msra.mxu0 0.0
        %519 = vmatprep.subr.mxu0 0.0
        %520 = vmatpush1.msra.mxu0 0.0
        %521 = vmatprep.subr.mxu0 0.0
        %522 = vmatpush1.msra.mxu0 0.0
        %523 = vmatprep.subr.mxu0 0.0
        %524 = vmatpush1.msra.mxu0 0.0
        %525 = vmatprep.subr.mxu0 0.0
        %526 = vmatpush1.msra.mxu0 0.0
        %527 = vmatprep.subr.mxu0 0.0
        %528 = vmatpush1.msra.mxu0 0.0
        %529 = vmatprep.subr.mxu0 0.0
        %530 = vmatpush1.msra.mxu0 0.0
        %531 = vmatprep.subr.mxu0 0.0
        %532 = vmatpush1.msra.mxu0 0.0
        %533 = vmatprep.subr.mxu0 0.0
        %534 = vmatpush1.msra.mxu0 0.0
        %535 = vmatprep.subr.mxu0 0.0
        %536 = vmatpush1.msra.mxu0 0.0
        %537 = vmatprep.subr.mxu0 0.0
        %538 = vmatpush1.msra.mxu0 0.0
        %539 = vmatprep.subr.mxu0 0.0
        %540 = vmatpush1.msra.mxu0 0.0
        %541 = vmatprep.subr.mxu0 0.0
        %542 = vmatpush1.msra.mxu0 0.0
        %543 = vmatprep.subr.mxu0 0.0
        %544 = vmatpush1.msra.mxu0 0.0
        %545 = vmatprep.subr.mxu0 0.0
        %546 = vmatpush1.msra.mxu0 0.0
        %547 = vmatprep.subr.mxu0 0.0
        %548 = vmatpush1.msra.mxu0 0.0
        %549 = vmatprep.subr.mxu0 0.0
        %550 = vmatpush1.msra.mxu0 0.0
        %551 = vmatprep.subr.mxu0 0.0
        %552 = vmatpush1.msra.mxu0 0.0
        %553 = vmatprep.subr.mxu0 0.0
        %554 = vmatpush1.msra.mxu0 0.0
        %555 = vmatprep.subr.mxu0 0.0
        %556 = vmatpush1.msra.mxu0 0.0
        %557 = vmatprep.subr.mxu0 0.0
        %558 = vmatpush1.msra.mxu0 0.0
        %559 = vmatprep.subr.mxu0 0.0
        %560 = vmatpush1.msra.mxu0 0.0
        %561 = vmatprep.subr.mxu0 0.0
        %562 = vmatpush1.msra.mxu0 0.0
        %563 = vmatprep.subr.mxu0 0.0
        %564 = vmatpush1.msra.mxu0 0.0
        %565 = vmatprep.subr.mxu0 0.0
        %566 = vmatpush1.msra.mxu0 0.0
        %567 = vmatprep.subr.mxu0 0.0
        %568 = vmatpush1.msra.mxu0 0.0
        %569 = vmatprep.subr.mxu0 0.0
        %570 = vmatpush1.msra.mxu0 0.0
        %571 = vmatprep.subr.mxu0 0.0
        %572 = vmatpush1.msra.mxu0 0.0
        %573 = vmatprep.mubr.f32.mxu0 0.0
        %574 = vmatmul.mubr.f32.gmra.mrb[0].mxu0 %v504
        %v575 = vpop.f32.mrb[0].mxu0
        %v576 = vadd.f32 %v495, %v575
        %v577 = vpop.f32.mrb[0].mxu0
        %578 = vmatprep.mubr.f32.mxu0 0.0
        %579 = vmatmul.mubr.f32.gmra.mrb[0].mxu0 %v507
        %v580 = vpop.f32.mrb[0].mxu0
        %v581 = vadd.f32 %v500, %v580
        %v582 = vpop.f32.mrb[0].mxu0
        %583 = vdwg.mxu0
        %v584 = vadd.f32 %v340, %v576
        %v585 = vadd.f32 %v341, %v581
        %586 = vst [vmem:[%s330] sm:$0xff] %v584
        %587 = vst [vmem:[%s330 + $0x8] sm:$0xff] %v585
        %s588 = sand.u32 %s182, 1
        %s589 = scalar_lea.sflag [#allocation4], %s588
        %s590 = sand.u32 %s182, 1
        %s591 = smul.addr %s590, 16
        %s592 = scalar_lea.vmem [#allocation3], %s591
        // Predicated region
        $region83: #{tpu_custom_call.1} parent=77 // pred_check
          %p593 = pneg %p192
        $region84: #{tpu_custom_call.1} parent=77 // pred_check_branch
          %595 = sbr.rel (%p593) target = $region86
        $region85: #{tpu_custom_call.1} parent=77 // pred_region
          %s597 = ssub.s32 256, 256
          %598 = vsyncadd %s589, %s597
          %s599 = smul.addr %s24, 4
          %s600 = sadd.s32 %s25, %s599
          %s601 = smul.addr %s600, 128
          %s602 = scalar_lea.hbm %s6, %s601
          %s603 = sshll.u32 %s592, 4
          %s604 = int_to_ptr.vmem [resolvable:$true] %s603
          %609 = dma.vmem_to_hbm [thread:$0]  %s604, 256, %s602, %s589, 128, 256, 8
        $region86: #{tpu_custom_call.1} parent=77 // pred_fallthru
          _
      $region78: #{tpu_custom_call.1} parent=5 // pred_fallthru
        _
      %p610 = scmp.le.s32.totalorder 2, %s15
      // Predicated region
      $region87: #{tpu_custom_call.1} parent=5 // pred_check
        %p611 = pneg %p610
      $region88: #{tpu_custom_call.1} parent=5 // pred_check_branch
        %613 = sbr.rel (%p611) target = $region90
      $region89: #{tpu_custom_call.1} parent=5 // pred_region
        %s614 = ssub.s32 %s15, 2
        // Predicated region
        $region91: #{tpu_custom_call.1} parent=89 // pred_check
          %p615 = pneg %p198
        $region92: #{tpu_custom_call.1} parent=89 // pred_check_branch
          %617 = sbr.rel (%p615) target = $region94
        $region93: #{tpu_custom_call.1} parent=89 // pred_region
          %s618 = sand.u32 %s183, 1
          %s619 = scalar_lea.sflag [#allocation4], %s618
          %s620 = sand.u32 %s183, 1
          %s621 = smul.addr %s620, 16
          %s622 = scalar_lea.vmem [#allocation3], %s621
          %623 = dma.done %s619, 256
        $region94: #{tpu_custom_call.1} parent=89 // pred_fallthru
          _
      $region90: #{tpu_custom_call.1} parent=5 // pred_fallthru
        _
    $region6: #{tpu_custom_call.1} parent=1 // loop_footer
      %s19 = sadd.s32 1, %s15
    $region7: #{tpu_custom_call.1} parent=1 // loop_footer_branch
      %14 = sbr.rel target = $region3
    $region8: #{tpu_custom_call.1} parent=1 // loop_exit
      _
    %624 = vsyncpa [#allocation4], 1
    %s625 = scalar_lea.sflag [#allocation4], 1
    %626 = vsyncpa %s625, 1

</llo_original>
